<compile_context>
chip_gen: v5e
topology: v5e:2x2
jax: 0.10.0
libtpu: 0.0.40
codegen_flags: <defaults>
</compile_context>

<pallas_src>
import functools

import jax
import jax.numpy as jnp
from jax.experimental import pallas as pl
from jax.experimental.pallas import tpu as pltpu


# -----------------------------------------------------------------------------
# Irreps bookkeeping (plain-Python glue mirroring EquivariantGate.__init__)
# -----------------------------------------------------------------------------
def build_gate_structure(irreps_x):
    """irreps_x: list of (mul, l, parity) with parity in {+1, -1}."""
    scalars = [(m, l, p) for (m, l, p) in irreps_x if l == 0]
    gated = [(m, l, p) for (m, l, p) in irreps_x if l > 0]
    gate_parity = 1 if any(p == 1 for (_, _, p) in scalars) else -1
    # TODO(synk): e3nn's _Sortcut interleaves 0e/0o scalar columns when both
    # parities are present; this kernel covers the common all-even-scalar case.
    assert all(p == 1 for (_, _, p) in scalars), "only even scalars supported here"
    d_s = sum(m for (m, _, _) in scalars)
    d_g = sum(m for (m, _, _) in gated)
    d_gated = sum(m * (2 * l + 1) for (m, l, _) in gated)
    return scalars, gated, gate_parity, d_s, d_g, d_gated


def build_gate_expand_matrix_T(gated, d_g, d_gated):
    """E^T[k, j] = 1 iff gated row k is gated by gate scalar j.
    In feature-major layout, (E^T @ ag) broadcasts each activated gate over its
    (2l+1) components."""
    rows = []
    gate_base = 0
    for mul, l, _ in gated:
        dim = 2 * l + 1
        for m in range(mul):
            rows.extend([gate_base + m] * dim)
        gate_base += mul
    E_T = jnp.zeros((d_gated, d_g), dtype=jnp.float32)
    E_T = E_T.at[jnp.arange(d_gated), jnp.asarray(rows)].set(1.0)
    return E_T


def normalize2mom_const(act, key, n=1_000_000):
    """e3nn normalize2mom: c such that E[(c * act(z))^2] = 1, z ~ N(0, 1)."""
    z = jax.random.normal(key, (n,), dtype=jnp.float32)
    return float(1.0 / jnp.sqrt(jnp.mean(act(z) ** 2)))


# -----------------------------------------------------------------------------
# Pallas kernel (the hot path: activations + gate broadcast-multiply)
# -----------------------------------------------------------------------------
def make_gate_kernel(d_s, d_g, act_scalar, act_gate, c_scalar, c_gate):
    def kernel(x_ref, et_ref, o_ref):
        # Feature-major tile: (D_in, tile_n). Compute in f32 regardless of I/O
        # dtype (v5e VPU/EUP have no bf16 paths).
        x = x_ref[...].astype(jnp.float32)
        s = x[:d_s, :]                                   # (d_s,     T) scalars
        g = x[d_s:d_s + d_g, :]                          # (d_g,     T) gates
        z = x[d_s + d_g:, :]                             # (d_gated, T) gated

        out_s = act_scalar(s) * c_scalar                 # e3nn Activation (normalized)
        ag = act_gate(g) * c_gate                        # activated gates

        # Broadcast each activated gate over its (2l+1) components with one
        # small MXU matmul against the static 0/1 expansion matrix, then gate.
        gate_bcast = jnp.dot(et_ref[...], ag,
                             preferred_element_type=jnp.float32)   # (d_gated, T)
        out_z = gate_bcast * z                           # ElementwiseTP (l x 0e)

        # Direct sub-view stores (no concatenate -> no extra VMEM temporary).
        # Sublane offsets 0 and d_s(=8) are tile-aligned for f32.
        o_ref[:d_s, :] = out_s.astype(o_ref.dtype)
        o_ref[d_s:, :] = out_z.astype(o_ref.dtype)

    return kernel


def equivariant_gate_forward(x_fm, E_T, *, d_s, d_g, d_gated,
                             act_scalar, act_gate, c_scalar, c_gate,
                             tile_n=512):
    """x_fm: feature-major node features, shape (D_in, N_nodes)."""
    d_in, n = x_fm.shape
    assert d_in == d_s + d_g + d_gated
    d_out = d_s + d_gated

    # Lane axis = node axis: keep the tile a multiple of 128 lanes, as large as
    # useful (amortizes ~600-cycle per-step overhead), but never larger than
    # the (128-rounded) node count so small inputs still work and the grid
    # stays >= 2 for realistic N (lets "parallel" shard across v7x's 2 TCs).
    tile_n = max(128, min(tile_n, pl.cdiv(n, 128) * 128))
    grid = (pl.cdiv(n, tile_n),)

    kernel = make_gate_kernel(d_s, d_g, act_scalar, act_gate, c_scalar, c_gate)

    return pl.pallas_call(
        kernel,
        out_shape=jax.ShapeDtypeStruct((d_out, n), x_fm.dtype),
        grid_spec=pltpu.PrefetchScalarGridSpec(
            num_scalar_prefetch=0,
            grid=grid,
            in_specs=[
                # Node-tiled, feature-major input block (lane-dense).
                pl.BlockSpec((d_in, tile_n), lambda i: (0, i)),
                # Tiny (64x16) expansion matrix: constant block index => stays
                # resident in VMEM, no per-step re-DMA.
                pl.BlockSpec((d_gated, d_g), lambda i: (0, 0)),
            ],
            out_specs=pl.BlockSpec((d_out, tile_n), lambda i: (0, i)),
        ),
        compiler_params=pltpu.CompilerParams(
            dimension_semantics=("parallel",),
            # double-buffered in+out at tile_n=2048 is only ~2.6 MiB; leave
            # ample headroom even for v5e's 16 MiB scoped default.
            vmem_limit_bytes=32 << 20,
        ),
    )(x_fm, E_T)


# -----------------------------------------------------------------------------
# Pure-JAX reference (e3nn Gate semantics, node-major) for a correctness check
# -----------------------------------------------------------------------------
def gate_reference(x, gated, d_s, d_g, act_scalar, act_gate, c_scalar, c_gate):
    s = x[:, :d_s]
    g = x[:, d_s:d_s + d_g]
    z = x[:, d_s + d_g:]
    parts = [act_scalar(s) * c_scalar]
    ag = act_gate(g) * c_gate
    off_g, off_z = 0, 0
    for mul, l, _ in gated:
        dim = 2 * l + 1
        gate_blk = ag[:, off_g:off_g + mul]                          # (N, mul)
        z_blk = z[:, off_z:off_z + mul * dim].reshape(-1, mul, dim)  # (N, mul, 2l+1)
        parts.append((z_blk * gate_blk[:, :, None]).reshape(-1, mul * dim))
        off_g += mul
        off_z += mul * dim
    return jnp.concatenate(parts, axis=-1)


# -----------------------------------------------------------------------------
if __name__ == "__main__":
    # irreps_x = 8x0e + 8x1o + 8x2e   (mul, l, parity)
    irreps_x = [(8, 0, 1), (8, 1, -1), (8, 2, 1)]
    scalars, gated, gate_parity, d_s, d_g, d_gated = build_gate_structure(irreps_x)
    d_in = d_s + d_g + d_gated          # 88  == gate.irreps_in.dim
    d_out = d_s + d_gated               # 72  == gate.irreps_out.dim

    # HIENet-style activation dicts: {'e': silu, 'o': tanh}
    act_by_parity = {1: jax.nn.silu, -1: jnp.tanh}
    act_scalar = act_by_parity[1]                 # all scalars are 0e here
    act_gate = act_by_parity[gate_parity]         # gates are 0e -> silu

    # e3nn normalize2mom constants (deterministic MC, as e3nn defines them)
    key = jax.random.PRNGKey(0)
    k_norm_s, k_norm_g, k_x = jax.random.split(key, 3)
    c_scalar = normalize2mom_const(act_scalar, k_norm_s)
    c_gate = normalize2mom_const(act_gate, k_norm_g)

    # Static gate-expansion matrix (structural constant, not a learned weight)
    E_T = build_gate_expand_matrix_T(gated, d_g, d_gated)     # (64, 16)

    # Deterministic example input, produced directly in feature-major layout
    # (upstream layout decision; in a real model the producing op would emit
    # this layout — no per-call transpose in the hot path).
    n_nodes = 1024
    x_fm = jax.random.normal(k_x, (d_in, n_nodes), dtype=jnp.float32)

    out_fm = equivariant_gate_forward(
        x_fm, E_T, d_s=d_s, d_g=d_g, d_gated=d_gated,
        act_scalar=act_scalar, act_gate=act_gate,
        c_scalar=c_scalar, c_gate=c_gate, tile_n=512)
    out_fm = jax.block_until_ready(out_fm)

    ref = gate_reference(x_fm.T, gated, d_s, d_g,
                         act_scalar, act_gate, c_scalar, c_gate)
    assert out_fm.shape == (d_out, n_nodes), out_fm.shape
    assert jnp.allclose(out_fm.T, ref, rtol=1e-5, atol=1e-5), \
        float(jnp.max(jnp.abs(out_fm.T - ref)))

    print("KERNEL_OK")
</pallas_src>

<mosaic_0001>
module attributes {stable_mosaic.version = 11 : i64} {
  func.func @kernel(%arg0: i32, %arg1: memref<88x512xf32, #tpu.memory_space<vmem>>, %arg2: memref<64x16xf32, #tpu.memory_space<vmem>>, %arg3: memref<72x512xf32, #tpu.memory_space<vmem>>) attributes {dimension_semantics = [#tpu.dimension_semantics<parallel>], iteration_bounds = array<i64: 2>, scalar_prefetch = 0 : i64, scratch_operands = 0 : i64, tpu.core_type = #tpu.core_type<tc>, window_params = [{transform_indices = @transform_0, window_bounds = array<i64: 88, 512>}, {pipeline_mode = #tpu.pipeline_mode<synchronous>, transform_indices = @transform_1, window_bounds = array<i64: 64, 16>}, {transform_indices = @transform_2, window_bounds = array<i64: 72, 512>}]} {
    %c0 = arith.constant 0 : index
    %c0_0 = arith.constant 0 : index
    %0 = vector.load %arg1[%c0, %c0_0] : memref<88x512xf32, #tpu.memory_space<vmem>>, vector<88x512xf32>
    %1 = vector.extract_strided_slice %0 {offsets = [0, 0], sizes = [8, 512], strides = [1, 1]} : vector<88x512xf32> to vector<8x512xf32>
    %2 = vector.extract_strided_slice %0 {offsets = [8, 0], sizes = [16, 512], strides = [1, 1]} : vector<88x512xf32> to vector<16x512xf32>
    %3 = vector.extract_strided_slice %0 {offsets = [24, 0], sizes = [64, 512], strides = [1, 1]} : vector<88x512xf32> to vector<64x512xf32>
    %4 = arith.negf %1 : vector<8x512xf32>
    %5 = math.exp %4 : vector<8x512xf32>
    %cst = arith.constant 1.000000e+00 : f32
    %6 = vector.broadcast %cst : f32 to vector<8x512xf32>
    %7 = arith.addf %6, %5 : vector<8x512xf32>
    %8 = arith.divf %6, %7 : vector<8x512xf32>
    %9 = arith.mulf %1, %8 : vector<8x512xf32>
    %cst_1 = arith.constant 1.67853653 : f32
    %10 = vector.broadcast %cst_1 : f32 to vector<8x512xf32>
    %11 = arith.mulf %9, %10 : vector<8x512xf32>
    %12 = arith.negf %2 : vector<16x512xf32>
    %13 = math.exp %12 : vector<16x512xf32>
    %cst_2 = arith.constant 1.000000e+00 : f32
    %14 = vector.broadcast %cst_2 : f32 to vector<16x512xf32>
    %15 = arith.addf %14, %13 : vector<16x512xf32>
    %16 = arith.divf %14, %15 : vector<16x512xf32>
    %17 = arith.mulf %2, %16 : vector<16x512xf32>
    %cst_3 = arith.constant 1.67439103 : f32
    %18 = vector.broadcast %cst_3 : f32 to vector<16x512xf32>
    %19 = arith.mulf %17, %18 : vector<16x512xf32>
    %c0_4 = arith.constant 0 : index
    %c0_5 = arith.constant 0 : index
    %20 = vector.load %arg2[%c0_4, %c0_5] : memref<64x16xf32, #tpu.memory_space<vmem>>, vector<64x16xf32>
    %cst_6 = arith.constant dense<0.000000e+00> : vector<64x512xf32>
    %21 = tpu.matmul %20, %19, %cst_6 {dimension_numbers = #tpu.dot_dimension_numbers<[1], [0], [0], [1], [0, 0, 1, 1], [], []>} : vector<64x16xf32>, vector<16x512xf32>, vector<64x512xf32> -> vector<64x512xf32>
    %22 = arith.mulf %21, %3 : vector<64x512xf32>
    %c0_7 = arith.constant 0 : index
    %c0_8 = arith.constant 0 : index
    %23 = vector.load %arg3[%c0_7, %c0_8] : memref<72x512xf32, #tpu.memory_space<vmem>>, vector<8x512xf32>
    tpu.vector_store %arg3[%c0_7, %c0_8], %11 {strides = array<i32>} : memref<72x512xf32, #tpu.memory_space<vmem>>, vector<8x512xf32>,
    %c8 = arith.constant 8 : index
    %c0_9 = arith.constant 0 : index
    %24 = vector.load %arg3[%c8, %c0_9] : memref<72x512xf32, #tpu.memory_space<vmem>>, vector<64x512xf32>
    tpu.vector_store %arg3[%c8, %c0_9], %22 {strides = array<i32>} : memref<72x512xf32, #tpu.memory_space<vmem>>, vector<64x512xf32>,
    return
  }
  func.func @transform_0(%arg0: i32) -> (i32, i32) {
    %c0_i32 = arith.constant 0 : i32
    %c0_i32_0 = arith.constant 0 : i32
    return %c0_i32, %arg0 : i32, i32
  }
  func.func @transform_1(%arg0: i32) -> (i32, i32) {
    %c0_i32 = arith.constant 0 : i32
    %c0_i32_0 = arith.constant 0 : i32
    %c0_i32_1 = arith.constant 0 : i32
    return %c0_i32, %c0_i32_0 : i32, i32
  }
  func.func @transform_2(%arg0: i32) -> (i32, i32) {
    %c0_i32 = arith.constant 0 : i32
    %c0_i32_0 = arith.constant 0 : i32
    return %c0_i32, %arg0 : i32, i32
  }
}

</mosaic_0001>

<llo_original>
// kernel: tpu_custom_call.1
$region0: #{tpu_custom_call.1}
  #allocation0 [shape = 'u32[]', space=smem, size = 0x4, offset = 0x4, fixed_abs, tag = 'smem constant byte address 0x4 - core index']
  #allocation1 [shape = 'u32[72,128]{1,0:T(1,128)}', space=vmem, size = 0x9000, scoped, tag = 'internal scratch']
  %s0 = inlined_call_operand.hbm [shape: f32[88,1024], index: 0, kind: input, shape index: {}]
  %s1 = inlined_call_operand.vmem [shape: f32[64,16], index: 1, kind: input, shape index: {}]
  %s2 = inlined_call_operand.hbm [shape: f32[72,1024], index: 2, kind: output, shape index: {}]
  %s3 = sld [smem:[#allocation0]]
  $region45: #{tpu_custom_call.1} parent=0
    _
  %s5 = ssub.s32 1, %s3
  %s6 = scalar_select 0, %s5, %s3
  $region1: #{tpu_custom_call.1} parent=0
    #allocation2 [shape = 'u8[360448]{0}', space=vmem, size = 0x58000, scoped, tag = 'input window, operand 0']
    #allocation3 [shape = 's32[2]{0}', space=sflag, size = 0x8, scoped, tag = 'scoped memory for tpu_custom_call.1']
    #allocation4 [shape = 's32[2]{0}', space=sflag, size = 0x8, scoped, tag = 'scoped memory for tpu_custom_call.1']
    #allocation5 [shape = 'u8[294912]{0}', space=vmem, size = 0x48000, scoped, tag = 'output window, operand 0']
    %7 = vsyncpa [#allocation3], 0
    %s8 = scalar_lea.sflag [#allocation3], 1
    %9 = vsyncpa %s8, 0
    %10 = vsyncpa [#allocation4], 0
    %s11 = scalar_lea.sflag [#allocation4], 1
    %12 = vsyncpa %s11, 0
    loop: start=0, step=1, limit=4
    $region2: #{tpu_custom_call.1} parent=1 // loop_pre_header
      _
    $region3: #{tpu_custom_call.1} parent=1 // loop_header
      %s14 = sphi 0, %s18
      %p15 = scmp.ge.s32.totalorder %s14, 4
      %s24 = sphi 0, %s26
      %s27 = sphi 0, %s24
      %s28 = sphi 0, %s27
      %s44 = sphi 0, %s28
      %s48 = sphi 0, %s48
      %s50 = sphi 0, %s48
      %s51 = sphi 0, %s50
      %s65 = sphi 0, %s51
      %s71 = sphi 0, %s73
      %s74 = sphi 0, %s71
      %s75 = sphi 0, %s74
      %s91 = sphi 0, %s75
    $region4: #{tpu_custom_call.1} parent=1 // loop_header_branch
      %17 = sbr.rel (%p15) target = $region8
    $region5: #{tpu_custom_call.1} parent=1 // loop_body
      %s19 = ssub.s32 %s14, 1
      %s20 = ssub.s32 %s14, 2
      %s21 = sadd.s32 %s14, 1
      %s22 = ssub.s32 %s14, %s21
      %p23 = scmp.eq.s32.totalorder %s22, 0
      %s25 = sadd.s32 %s24, 1
      %s26 = scalar_select %p23, %s24, %s25
      %p29 = pneg %p23
      %p30 = scmp.eq.s32.totalorder %s14, 1
      %p31 = por %p29, %p30
      %p32 = scmp.ne.s32.totalorder %s24, %s27
      %p33 = scmp.eq.s32.totalorder %s14, 0
      %p34 = por %p32, %p33
      %p35 = scmp.ne.s32.totalorder %s24, %s27
      %p36 = scmp.eq.s32.totalorder %s19, 1
      %p37 = por %p35, %p36
      %p38 = scmp.ne.s32.totalorder %s27, %s28
      %p39 = scmp.eq.s32.totalorder %s19, 0
      %p40 = por %p38, %p39
      %p41 = scmp.ne.s32.totalorder %s27, %s28
      %p42 = scmp.eq.s32.totalorder %s20, 1
      %p43 = por %p41, %p42
      %p45 = scmp.ne.s32.totalorder %s28, %s44
      %p46 = scmp.eq.s32.totalorder %s20, 0
      %p47 = por %p45, %p46
      %s49 = sadd.s32 %s48, 1
      %p52 = scmp.eq.s32.totalorder %s14, 1
      %p53 = scmp.ne.s32.totalorder %s48, %s50
      %p54 = scmp.eq.s32.totalorder %s14, 0
      %p55 = por %p53, %p54
      %p56 = scmp.ne.s32.totalorder %s48, %s50
      %p57 = scmp.eq.s32.totalorder %s19, 1
      %p58 = por %p56, %p57
      %p59 = scmp.ne.s32.totalorder %s50, %s51
      %p60 = scmp.eq.s32.totalorder %s19, 0
      %p61 = por %p59, %p60
      %p62 = scmp.ne.s32.totalorder %s50, %s51
      %p63 = scmp.eq.s32.totalorder %s20, 1
      %p64 = por %p62, %p63
      %p66 = scmp.ne.s32.totalorder %s51, %s65
      %p67 = scmp.eq.s32.totalorder %s20, 0
      %p68 = por %p66, %p67
      %s69 = ssub.s32 %s14, %s21
      %p70 = scmp.eq.s32.totalorder %s69, 0
      %s72 = sadd.s32 %s71, 1
      %s73 = scalar_select %p70, %s71, %s72
      %p76 = pneg %p70
      %p77 = scmp.eq.s32.totalorder %s14, 1
      %p78 = por %p76, %p77
      %p79 = scmp.ne.s32.totalorder %s71, %s74
      %p80 = scmp.eq.s32.totalorder %s14, 0
      %p81 = por %p79, %p80
      %p82 = scmp.ne.s32.totalorder %s71, %s74
      %p83 = scmp.eq.s32.totalorder %s19, 1
      %p84 = por %p82, %p83
      %p85 = scmp.ne.s32.totalorder %s74, %s75
      %p86 = scmp.eq.s32.totalorder %s19, 0
      %p87 = por %p85, %p86
      %p88 = scmp.ne.s32.totalorder %s74, %s75
      %p89 = scmp.eq.s32.totalorder %s20, 1
      %p90 = por %p88, %p89
      %p92 = scmp.ne.s32.totalorder %s75, %s91
      %p93 = scmp.eq.s32.totalorder %s20, 0
      %p94 = por %p92, %p93
      %p95 = scmp.le.s32.totalorder 1, %s14
      %p96 = scmp.lt.s32.totalorder %s14, 3
      %p97 = pnand %p95, %p96
      %p98 = pneg %p97
      // Predicated region
      $region9: #{tpu_custom_call.1} parent=5 // pred_check
        _
      $region10: #{tpu_custom_call.1} parent=5 // pred_check_branch
        %100 = sbr.rel (%p97) target = $region12
      $region11: #{tpu_custom_call.1} parent=5 // pred_region
        %s101 = ssub.s32 %s14, 1
        // Predicated region
        $region13: #{tpu_custom_call.1} parent=11 // pred_check
          %p102 = pneg %p61
        $region14: #{tpu_custom_call.1} parent=11 // pred_check_branch
          %104 = sbr.rel (%p102) target = $region16
        $region15: #{tpu_custom_call.1} parent=11 // pred_region
          _
        $region16: #{tpu_custom_call.1} parent=11 // pred_fallthru
          _
      $region12: #{tpu_custom_call.1} parent=5 // pred_fallthru
        _
      %p105 = scmp.lt.s32.totalorder %s14, 2
      // Predicated region
      $region17: #{tpu_custom_call.1} parent=5 // pred_check
        %p106 = pneg %p105
      $region18: #{tpu_custom_call.1} parent=5 // pred_check_branch
        %108 = sbr.rel (%p106) target = $region20
      $region19: #{tpu_custom_call.1} parent=5 // pred_region
        // Predicated region
        $region21: #{tpu_custom_call.1} parent=19 // pred_check
          %p109 = pneg %p34
        $region22: #{tpu_custom_call.1} parent=19 // pred_check_branch
          %111 = sbr.rel (%p109) target = $region24
        $region23: #{tpu_custom_call.1} parent=19 // pred_region
          %s112 = sand.u32 %s24, 1
          %s113 = scalar_lea.sflag [#allocation3], %s112
          %s114 = sand.u32 %s24, 1
          %s115 = smul.addr %s114, 352
          %s116 = scalar_lea.vmem [#allocation2], %s115
          %s117 = smul.u32 4, %s14
          %119 = vsyncadd %s113, 0
          %s120 = smul.addr %s117, 8
          %s121 = scalar_lea.hbm %s0, %s120
          %s122 = sshll.u32 %s121, 4
          %s123 = int_to_ptr.hbm [resolvable:$true] %s122
          %s124 = sshll.u32 %s116, 4
          %s125 = int_to_ptr.vmem [resolvable:$true] %s124
          %130 = dma.hbm_to_vmem [thread:$0]  %s123, 5632, %s125, %s113, 1024, 512, 32
        $region24: #{tpu_custom_call.1} parent=19 // pred_fallthru
          _
      $region20: #{tpu_custom_call.1} parent=5 // pred_fallthru
        _
      %p131 = scmp.le.s32.totalorder 1, %s14
      %p132 = scmp.lt.s32.totalorder %s14, 3
      %p133 = pnand %p131, %p132
      %p134 = pneg %p133
      // Predicated region
      $region25: #{tpu_custom_call.1} parent=5 // pred_check
        _
      $region26: #{tpu_custom_call.1} parent=5 // pred_check_branch
        %136 = sbr.rel (%p133) target = $region28
      $region27: #{tpu_custom_call.1} parent=5 // pred_region
        %s137 = ssub.s32 %s14, 1
        %s138 = sand.u32 %s27, 1
        %s139 = scalar_lea.sflag [#allocation3], %s138
        %s140 = sand.u32 %s27, 1
        %s141 = smul.addr %s140, 352
        %s142 = scalar_lea.vmem [#allocation2], %s141
        // Predicated region
        $region29: #{tpu_custom_call.1} parent=27 // pred_check
          %p143 = pneg %p40
        $region30: #{tpu_custom_call.1} parent=27 // pred_check_branch
          %145 = sbr.rel (%p143) target = $region32
        $region31: #{tpu_custom_call.1} parent=27 // pred_region
          %147 = dma.done %s139, 5632
        $region32: #{tpu_custom_call.1} parent=27 // pred_fallthru
          _
        %s148 = sand.u32 %s27, 1
        %s149 = scalar_lea.sflag [#allocation3], %s148
        %s150 = sand.u32 %s27, 1
        %s151 = smul.addr %s150, 352
        %s152 = scalar_lea.vmem [#allocation2], %s151
        %p153 = pneg %p40
        %p154 = pneg %p37
        %p155 = pneg %p61
        %p156 = pneg %p58
        %p157 = pneg %p87
        %p158 = pneg %p84
        %s159 = sand.u32 %s74, 1
        %s160 = scalar_lea.sflag [#allocation4], %s159
        %s161 = sand.u32 %s74, 1
        %s162 = smul.addr %s161, 288
        %s163 = scalar_lea.vmem [#allocation5], %s162
        %s164 = smul.u32 4, %s19
        %s165 = smul.u32 4, %s19
        %v166 = vld [vmem:[%s142] sm:$0xff]
        %v167 = vld [vmem:[%s142 + $0x8] sm:$0xff]
        %v168 = vld [vmem:[%s142 + $0x10] sm:$0xff]
        %v169 = vld [vmem:[%s142 + $0x18] sm:$0xff]
        %v170 = vld [vmem:[%s142 + $0x20] sm:$0xff]
        %v171 = vld [vmem:[%s142 + $0x28] sm:$0xff]
        %v172 = vld [vmem:[%s142 + $0x30] sm:$0xff]
        %v173 = vld [vmem:[%s142 + $0x38] sm:$0xff]
        %v174 = vld [vmem:[%s142 + $0x40] sm:$0xff]
        %v175 = vld [vmem:[%s142 + $0x48] sm:$0xff]
        %v176 = vld [vmem:[%s142 + $0x50] sm:$0xff]
        %v177 = vld [vmem:[%s142 + $0x58] sm:$0xff]
        %v178 = vld [vmem:[%s142 + $0x60] sm:$0xff]
        %v179 = vld [vmem:[%s142 + $0x68] sm:$0xff]
        %v180 = vld [vmem:[%s142 + $0x70] sm:$0xff]
        %v181 = vld [vmem:[%s142 + $0x78] sm:$0xff]
        %v182 = vld [vmem:[%s142 + $0x80] sm:$0xff]
        %v183 = vld [vmem:[%s142 + $0x88] sm:$0xff]
        %v184 = vld [vmem:[%s142 + $0x90] sm:$0xff]
        %v185 = vld [vmem:[%s142 + $0x98] sm:$0xff]
        %v186 = vld [vmem:[%s142 + $0xa0] sm:$0xff]
        %v187 = vld [vmem:[%s142 + $0xa8] sm:$0xff]
        %v188 = vld [vmem:[%s142 + $0xb0] sm:$0xff]
        %v189 = vld [vmem:[%s142 + $0xb8] sm:$0xff]
        %v190 = vld [vmem:[%s142 + $0xc0] sm:$0xff]
        %v191 = vld [vmem:[%s142 + $0xc8] sm:$0xff]
        %v192 = vld [vmem:[%s142 + $0xd0] sm:$0xff]
        %v193 = vld [vmem:[%s142 + $0xd8] sm:$0xff]
        %v194 = vld [vmem:[%s142 + $0xe0] sm:$0xff]
        %v195 = vld [vmem:[%s142 + $0xe8] sm:$0xff]
        %v196 = vld [vmem:[%s142 + $0xf0] sm:$0xff]
        %v197 = vld [vmem:[%s142 + $0xf8] sm:$0xff]
        %v198 = vld [vmem:[%s142 + $0x100] sm:$0xff]
        %v199 = vld [vmem:[%s142 + $0x108] sm:$0xff]
        %v200 = vld [vmem:[%s142 + $0x110] sm:$0xff]
        %v201 = vld [vmem:[%s142 + $0x118] sm:$0xff]
        %v202 = vld [vmem:[%s142 + $0x120] sm:$0xff]
        %v203 = vld [vmem:[%s142 + $0x128] sm:$0xff]
        %v204 = vld [vmem:[%s142 + $0x130] sm:$0xff]
        %v205 = vld [vmem:[%s142 + $0x138] sm:$0xff]
        %v206 = vld [vmem:[%s142 + $0x140] sm:$0xff]
        %v207 = vld [vmem:[%s142 + $0x148] sm:$0xff]
        %v208 = vld [vmem:[%s142 + $0x150] sm:$0xff]
        %v209 = vld [vmem:[%s142 + $0x158] sm:$0xff]
        %v210 = vxor.u32 %v166, 2147483648
        %v211 = vxor.u32 %v167, 2147483648
        %v212 = vxor.u32 %v168, 2147483648
        %v213 = vxor.u32 %v169, 2147483648
        %v214 = vmul.f32 %v210, 1.442695
        %v215 = vpow.pop %v214
        %v216 = vmul.f32 %v211, 1.442695
        %v217 = vpow.pop %v216
        %v218 = vmul.f32 %v212, 1.442695
        %v219 = vpow.pop %v218
        %v220 = vmul.f32 %v213, 1.442695
        %v221 = vpow.pop %v220
        %v222 = vadd.f32 %v215, 1.0
        %v223 = vadd.f32 %v217, 1.0
        %v224 = vadd.f32 %v219, 1.0
        %v225 = vadd.f32 %v221, 1.0
        %v226 = vrcp.pop %v222
        %v227 = vmul.f32 %v222, %v226
        %v228 = vsub.f32 1.0, %v227
        %v229 = vmul.f32 %v226, %v228
        %v230 = vadd.f32 %v226, %v229
        %vm231 = vweird.f32 %v222
        %vm232 = vweird.f32 %v226
        %vm233 = vmor %vm231, %vm232
        %v234 = vsel %vm233, %v226, %v230
        %v235 = vand.u32 2147483647, %v222
        %vm236 = vcmp.eq.f32.partialorder %v235, 8.507059e+37
        %v237 = vand.u32 %v222, 2147483648
        %v238 = vor.u32 1.1754944e-38, %v237
        %v239 = vsel %vm236, %v238, %v234
        %v240 = vmul.f32 1.0, %v239
        %v241 = vrcp.pop %v223
        %v242 = vmul.f32 %v223, %v241
        %v243 = vsub.f32 1.0, %v242
        %v244 = vmul.f32 %v241, %v243
        %v245 = vadd.f32 %v241, %v244
        %vm246 = vweird.f32 %v223
        %vm247 = vweird.f32 %v241
        %vm248 = vmor %vm246, %vm247
        %v249 = vsel %vm248, %v241, %v245
        %v250 = vand.u32 2147483647, %v223
        %vm251 = vcmp.eq.f32.partialorder %v250, 8.507059e+37
        %v252 = vand.u32 %v223, 2147483648
        %v253 = vor.u32 1.1754944e-38, %v252
        %v254 = vsel %vm251, %v253, %v249
        %v255 = vmul.f32 1.0, %v254
        %v256 = vrcp.pop %v224
        %v257 = vmul.f32 %v224, %v256
        %v258 = vsub.f32 1.0, %v257
        %v259 = vmul.f32 %v256, %v258
        %v260 = vadd.f32 %v256, %v259
        %vm261 = vweird.f32 %v224
        %vm262 = vweird.f32 %v256
        %vm263 = vmor %vm261, %vm262
        %v264 = vsel %vm263, %v256, %v260
        %v265 = vand.u32 2147483647, %v224
        %vm266 = vcmp.eq.f32.partialorder %v265, 8.507059e+37
        %v267 = vand.u32 %v224, 2147483648
        %v268 = vor.u32 1.1754944e-38, %v267
        %v269 = vsel %vm266, %v268, %v264
        %v270 = vmul.f32 1.0, %v269
        %v271 = vrcp.pop %v225
        %v272 = vmul.f32 %v225, %v271
        %v273 = vsub.f32 1.0, %v272
        %v274 = vmul.f32 %v271, %v273
        %v275 = vadd.f32 %v271, %v274
        %vm276 = vweird.f32 %v225
        %vm277 = vweird.f32 %v271
        %vm278 = vmor %vm276, %vm277
        %v279 = vsel %vm278, %v271, %v275
        %v280 = vand.u32 2147483647, %v225
        %vm281 = vcmp.eq.f32.partialorder %v280, 8.507059e+37
        %v282 = vand.u32 %v225, 2147483648
        %v283 = vor.u32 1.1754944e-38, %v282
        %v284 = vsel %vm281, %v283, %v279
        %v285 = vmul.f32 1.0, %v284
        %v286 = vmul.f32 %v166, %v240
        %v287 = vmul.f32 %v167, %v255
        %v288 = vmul.f32 %v168, %v270
        %v289 = vmul.f32 %v169, %v285
        %v290 = vmul.f32 %v286, 1.6785365
        %v291 = vmul.f32 %v287, 1.6785365
        %v292 = vmul.f32 %v288, 1.6785365
        %v293 = vmul.f32 %v289, 1.6785365
        %v294 = vxor.u32 %v170, 2147483648
        %v295 = vxor.u32 %v171, 2147483648
        %v296 = vxor.u32 %v172, 2147483648
        %v297 = vxor.u32 %v173, 2147483648
        %v298 = vxor.u32 %v174, 2147483648
        %v299 = vxor.u32 %v175, 2147483648
        %v300 = vxor.u32 %v176, 2147483648
        %v301 = vxor.u32 %v177, 2147483648
        %v302 = vmul.f32 %v294, 1.442695
        %v303 = vpow.pop %v302
        %v304 = vmul.f32 %v295, 1.442695
        %v305 = vpow.pop %v304
        %v306 = vmul.f32 %v296, 1.442695
        %v307 = vpow.pop %v306
        %v308 = vmul.f32 %v297, 1.442695
        %v309 = vpow.pop %v308
        %v310 = vmul.f32 %v298, 1.442695
        %v311 = vpow.pop %v310
        %v312 = vmul.f32 %v299, 1.442695
        %v313 = vpow.pop %v312
        %v314 = vmul.f32 %v300, 1.442695
        %v315 = vpow.pop %v314
        %v316 = vmul.f32 %v301, 1.442695
        %v317 = vpow.pop %v316
        %v318 = vadd.f32 %v303, 1.0
        %v319 = vadd.f32 %v305, 1.0
        %v320 = vadd.f32 %v307, 1.0
        %v321 = vadd.f32 %v309, 1.0
        %v322 = vadd.f32 %v311, 1.0
        %v323 = vadd.f32 %v313, 1.0
        %v324 = vadd.f32 %v315, 1.0
        %v325 = vadd.f32 %v317, 1.0
        %v326 = vrcp.pop %v318
        %v327 = vmul.f32 %v318, %v326
        %v328 = vsub.f32 1.0, %v327
        %v329 = vmul.f32 %v326, %v328
        %v330 = vadd.f32 %v326, %v329
        %vm331 = vweird.f32 %v318
        %vm332 = vweird.f32 %v326
        %vm333 = vmor %vm331, %vm332
        %v334 = vsel %vm333, %v326, %v330
        %v335 = vand.u32 2147483647, %v318
        %vm336 = vcmp.eq.f32.partialorder %v335, 8.507059e+37
        %v337 = vand.u32 %v318, 2147483648
        %v338 = vor.u32 1.1754944e-38, %v337
        %v339 = vsel %vm336, %v338, %v334
        %v340 = vmul.f32 1.0, %v339
        %v341 = vrcp.pop %v319
        %v342 = vmul.f32 %v319, %v341
        %v343 = vsub.f32 1.0, %v342
        %v344 = vmul.f32 %v341, %v343
        %v345 = vadd.f32 %v341, %v344
        %vm346 = vweird.f32 %v319
        %vm347 = vweird.f32 %v341
        %vm348 = vmor %vm346, %vm347
        %v349 = vsel %vm348, %v341, %v345
        %v350 = vand.u32 2147483647, %v319
        %vm351 = vcmp.eq.f32.partialorder %v350, 8.507059e+37
        %v352 = vand.u32 %v319, 2147483648
        %v353 = vor.u32 1.1754944e-38, %v352
        %v354 = vsel %vm351, %v353, %v349
        %v355 = vmul.f32 1.0, %v354
        %v356 = vrcp.pop %v320
        %v357 = vmul.f32 %v320, %v356
        %v358 = vsub.f32 1.0, %v357
        %v359 = vmul.f32 %v356, %v358
        %v360 = vadd.f32 %v356, %v359
        %vm361 = vweird.f32 %v320
        %vm362 = vweird.f32 %v356
        %vm363 = vmor %vm361, %vm362
        %v364 = vsel %vm363, %v356, %v360
        %v365 = vand.u32 2147483647, %v320
        %vm366 = vcmp.eq.f32.partialorder %v365, 8.507059e+37
        %v367 = vand.u32 %v320, 2147483648
        %v368 = vor.u32 1.1754944e-38, %v367
        %v369 = vsel %vm366, %v368, %v364
        %v370 = vmul.f32 1.0, %v369
        %v371 = vrcp.pop %v321
        %v372 = vmul.f32 %v321, %v371
        %v373 = vsub.f32 1.0, %v372
        %v374 = vmul.f32 %v371, %v373
        %v375 = vadd.f32 %v371, %v374
        %vm376 = vweird.f32 %v321
        %vm377 = vweird.f32 %v371
        %vm378 = vmor %vm376, %vm377
        %v379 = vsel %vm378, %v371, %v375
        %v380 = vand.u32 2147483647, %v321
        %vm381 = vcmp.eq.f32.partialorder %v380, 8.507059e+37
        %v382 = vand.u32 %v321, 2147483648
        %v383 = vor.u32 1.1754944e-38, %v382
        %v384 = vsel %vm381, %v383, %v379
        %v385 = vmul.f32 1.0, %v384
        %v386 = vrcp.pop %v322
        %v387 = vmul.f32 %v322, %v386
        %v388 = vsub.f32 1.0, %v387
        %v389 = vmul.f32 %v386, %v388
        %v390 = vadd.f32 %v386, %v389
        %vm391 = vweird.f32 %v322
        %vm392 = vweird.f32 %v386
        %vm393 = vmor %vm391, %vm392
        %v394 = vsel %vm393, %v386, %v390
        %v395 = vand.u32 2147483647, %v322
        %vm396 = vcmp.eq.f32.partialorder %v395, 8.507059e+37
        %v397 = vand.u32 %v322, 2147483648
        %v398 = vor.u32 1.1754944e-38, %v397
        %v399 = vsel %vm396, %v398, %v394
        %v400 = vmul.f32 1.0, %v399
        %v401 = vrcp.pop %v323
        %v402 = vmul.f32 %v323, %v401
        %v403 = vsub.f32 1.0, %v402
        %v404 = vmul.f32 %v401, %v403
        %v405 = vadd.f32 %v401, %v404
        %vm406 = vweird.f32 %v323
        %vm407 = vweird.f32 %v401
        %vm408 = vmor %vm406, %vm407
        %v409 = vsel %vm408, %v401, %v405
        %v410 = vand.u32 2147483647, %v323
        %vm411 = vcmp.eq.f32.partialorder %v410, 8.507059e+37
        %v412 = vand.u32 %v323, 2147483648
        %v413 = vor.u32 1.1754944e-38, %v412
        %v414 = vsel %vm411, %v413, %v409
        %v415 = vmul.f32 1.0, %v414
        %v416 = vrcp.pop %v324
        %v417 = vmul.f32 %v324, %v416
        %v418 = vsub.f32 1.0, %v417
        %v419 = vmul.f32 %v416, %v418
        %v420 = vadd.f32 %v416, %v419
        %vm421 = vweird.f32 %v324
        %vm422 = vweird.f32 %v416
        %vm423 = vmor %vm421, %vm422
        %v424 = vsel %vm423, %v416, %v420
        %v425 = vand.u32 2147483647, %v324
        %vm426 = vcmp.eq.f32.partialorder %v425, 8.507059e+37
        %v427 = vand.u32 %v324, 2147483648
        %v428 = vor.u32 1.1754944e-38, %v427
        %v429 = vsel %vm426, %v428, %v424
        %v430 = vmul.f32 1.0, %v429
        %v431 = vrcp.pop %v325
        %v432 = vmul.f32 %v325, %v431
        %v433 = vsub.f32 1.0, %v432
        %v434 = vmul.f32 %v431, %v433
        %v435 = vadd.f32 %v431, %v434
        %vm436 = vweird.f32 %v325
        %vm437 = vweird.f32 %v431
        %vm438 = vmor %vm436, %vm437
        %v439 = vsel %vm438, %v431, %v435
        %v440 = vand.u32 2147483647, %v325
        %vm441 = vcmp.eq.f32.partialorder %v440, 8.507059e+37
        %v442 = vand.u32 %v325, 2147483648
        %v443 = vor.u32 1.1754944e-38, %v442
        %v444 = vsel %vm441, %v443, %v439
        %v445 = vmul.f32 1.0, %v444
        %v446 = vmul.f32 %v170, %v340
        %v447 = vmul.f32 %v171, %v355
        %v448 = vmul.f32 %v172, %v370
        %v449 = vmul.f32 %v173, %v385
        %v450 = vmul.f32 %v174, %v400
        %v451 = vmul.f32 %v175, %v415
        %v452 = vmul.f32 %v176, %v430
        %v453 = vmul.f32 %v177, %v445
        %v454 = vmul.f32 %v446, 1.674391
        %v455 = vmul.f32 %v447, 1.674391
        %v456 = vmul.f32 %v448, 1.674391
        %v457 = vmul.f32 %v449, 1.674391
        %v458 = vmul.f32 %v450, 1.674391
        %v459 = vmul.f32 %v451, 1.674391
        %v460 = vmul.f32 %v452, 1.674391
        %v461 = vmul.f32 %v453, 1.674391
        %v462 = vld [vmem:[%s1] sm:$0xff]
        %v463 = vld [vmem:[%s1 + $0x8] sm:$0xff]
        %v464 = vld [vmem:[%s1 + $0x10] sm:$0xff]
        %v465 = vld [vmem:[%s1 + $0x18] sm:$0xff]
        %v466 = vld [vmem:[%s1 + $0x20] sm:$0xff]
        %v467 = vld [vmem:[%s1 + $0x28] sm:$0xff]
        %v468 = vld [vmem:[%s1 + $0x30] sm:$0xff]
        %v469 = vld [vmem:[%s1 + $0x38] sm:$0xff]
        %vm470 = vcmask 130048
        %v472 = vsel %vm470, %v462, 0
        %v475 = vsel %vm470, %v463, 0
        %v478 = vsel %vm470, %v464, 0
        %v481 = vsel %vm470, %v465, 0
        %v484 = vsel %vm470, %v466, 0
        %v487 = vsel %vm470, %v467, 0
        %v490 = vsel %vm470, %v468, 0
        %v493 = vsel %vm470, %v469, 0
        %495 = vmatpush.msra.mxu0 0.0
        %496 = vmatpush.msra.mxu0 0.0
        %497 = vmatpush.msra.mxu0 0.0
        %498 = vmatpush.msra.mxu0 0.0
        %499 = vmatpush.msra.mxu0 0.0
        %500 = vmatpush.msra.mxu0 0.0
        %501 = vmatpush.msra.mxu0 0.0
        %502 = vmatpush.msra.mxu0 0.0
        %503 = vmatpush.msra.mxu0 0.0
        %504 = vmatpush.msra.mxu0 0.0
        %505 = vmatpush.msra.mxu0 0.0
        %506 = vmatpush.msra.mxu0 0.0
        %507 = vmatpush.msra.mxu0 0.0
        %508 = vmatpush.msra.mxu0 0.0
        %509 = vmatpush.msra.mxu0 %v458
        %510 = vmatpush.msra.mxu0 %v454
        %511 = vmatmul.f32.gmra.mxu0 %v472
        %v512 = vpop.f32.mrf.mxu0
        %v513 = vadd.f32 0.0, %v512
        %514 = vmatmul.f32.gmra.mxu0 %v475
        %v515 = vpop.f32.mrf.mxu0
        %v516 = vadd.f32 0.0, %v515
        %517 = vmatmul.f32.gmra.mxu0 %v478
        %v518 = vpop.f32.mrf.mxu0
        %v519 = vadd.f32 0.0, %v518
        %520 = vmatmul.f32.gmra.mxu0 %v481
        %v521 = vpop.f32.mrf.mxu0
        %v522 = vadd.f32 0.0, %v521
        %523 = vmatmul.f32.gmra.mxu0 %v484
        %v524 = vpop.f32.mrf.mxu0
        %v525 = vadd.f32 0.0, %v524
        %526 = vmatmul.f32.gmra.mxu0 %v487
        %v527 = vpop.f32.mrf.mxu0
        %v528 = vadd.f32 0.0, %v527
        %529 = vmatmul.f32.gmra.mxu0 %v490
        %v530 = vpop.f32.mrf.mxu0
        %v531 = vadd.f32 0.0, %v530
        %532 = vmatmul.f32.gmra.mxu0 %v493
        %v533 = vpop.f32.mrf.mxu0
        %v534 = vadd.f32 0.0, %v533
        %535 = vdwg.mxu0
        %536 = vmatpush.msra.mxu0 0.0
        %537 = vmatpush.msra.mxu0 0.0
        %538 = vmatpush.msra.mxu0 0.0
        %539 = vmatpush.msra.mxu0 0.0
        %540 = vmatpush.msra.mxu0 0.0
        %541 = vmatpush.msra.mxu0 0.0
        %542 = vmatpush.msra.mxu0 0.0
        %543 = vmatpush.msra.mxu0 0.0
        %544 = vmatpush.msra.mxu0 0.0
        %545 = vmatpush.msra.mxu0 0.0
        %546 = vmatpush.msra.mxu0 0.0
        %547 = vmatpush.msra.mxu0 0.0
        %548 = vmatpush.msra.mxu0 0.0
        %549 = vmatpush.msra.mxu0 0.0
        %550 = vmatpush.msra.mxu0 %v459
        %551 = vmatpush.msra.mxu0 %v455
        %552 = vmatmul.f32.gmra.mxu0 %v472
        %v553 = vpop.f32.mrf.mxu0
        %v554 = vadd.f32 0.0, %v553
        %555 = vmatmul.f32.gmra.mxu0 %v475
        %v556 = vpop.f32.mrf.mxu0
        %v557 = vadd.f32 0.0, %v556
        %558 = vmatmul.f32.gmra.mxu0 %v478
        %v559 = vpop.f32.mrf.mxu0
        %v560 = vadd.f32 0.0, %v559
        %561 = vmatmul.f32.gmra.mxu0 %v481
        %v562 = vpop.f32.mrf.mxu0
        %v563 = vadd.f32 0.0, %v562
        %564 = vmatmul.f32.gmra.mxu0 %v484
        %v565 = vpop.f32.mrf.mxu0
        %v566 = vadd.f32 0.0, %v565
        %567 = vmatmul.f32.gmra.mxu0 %v487
        %v568 = vpop.f32.mrf.mxu0
        %v569 = vadd.f32 0.0, %v568
        %570 = vmatmul.f32.gmra.mxu0 %v490
        %v571 = vpop.f32.mrf.mxu0
        %v572 = vadd.f32 0.0, %v571
        %573 = vmatmul.f32.gmra.mxu0 %v493
        %v574 = vpop.f32.mrf.mxu0
        %v575 = vadd.f32 0.0, %v574
        %576 = vdwg.mxu0
        %577 = vmatpush.msra.mxu0 0.0
        %578 = vmatpush.msra.mxu0 0.0
        %579 = vmatpush.msra.mxu0 0.0
        %580 = vmatpush.msra.mxu0 0.0
        %581 = vmatpush.msra.mxu0 0.0
        %582 = vmatpush.msra.mxu0 0.0
        %583 = vmatpush.msra.mxu0 0.0
        %584 = vmatpush.msra.mxu0 0.0
        %585 = vmatpush.msra.mxu0 0.0
        %586 = vmatpush.msra.mxu0 0.0
        %587 = vmatpush.msra.mxu0 0.0
        %588 = vmatpush.msra.mxu0 0.0
        %589 = vmatpush.msra.mxu0 0.0
        %590 = vmatpush.msra.mxu0 0.0
        %591 = vmatpush.msra.mxu0 %v460
        %592 = vmatpush.msra.mxu0 %v456
        %593 = vmatmul.f32.gmra.mxu0 %v472
        %v594 = vpop.f32.mrf.mxu0
        %v595 = vadd.f32 0.0, %v594
        %596 = vmatmul.f32.gmra.mxu0 %v475
        %v597 = vpop.f32.mrf.mxu0
        %v598 = vadd.f32 0.0, %v597
        %599 = vmatmul.f32.gmra.mxu0 %v478
        %v600 = vpop.f32.mrf.mxu0
        %v601 = vadd.f32 0.0, %v600
        %602 = vmatmul.f32.gmra.mxu0 %v481
        %v603 = vpop.f32.mrf.mxu0
        %v604 = vadd.f32 0.0, %v603
        %605 = vmatmul.f32.gmra.mxu0 %v484
        %v606 = vpop.f32.mrf.mxu0
        %v607 = vadd.f32 0.0, %v606
        %608 = vmatmul.f32.gmra.mxu0 %v487
        %v609 = vpop.f32.mrf.mxu0
        %v610 = vadd.f32 0.0, %v609
        %611 = vmatmul.f32.gmra.mxu0 %v490
        %v612 = vpop.f32.mrf.mxu0
        %v613 = vadd.f32 0.0, %v612
        %614 = vmatmul.f32.gmra.mxu0 %v493
        %v615 = vpop.f32.mrf.mxu0
        %v616 = vadd.f32 0.0, %v615
        %617 = vdwg.mxu0
        %618 = vmatpush.msra.mxu0 0.0
        %619 = vmatpush.msra.mxu0 0.0
        %620 = vmatpush.msra.mxu0 0.0
        %621 = vmatpush.msra.mxu0 0.0
        %622 = vmatpush.msra.mxu0 0.0
        %623 = vmatpush.msra.mxu0 0.0
        %624 = vmatpush.msra.mxu0 0.0
        %625 = vmatpush.msra.mxu0 0.0
        %626 = vmatpush.msra.mxu0 0.0
        %627 = vmatpush.msra.mxu0 0.0
        %628 = vmatpush.msra.mxu0 0.0
        %629 = vmatpush.msra.mxu0 0.0
        %630 = vmatpush.msra.mxu0 0.0
        %631 = vmatpush.msra.mxu0 0.0
        %632 = vmatpush.msra.mxu0 %v461
        %633 = vmatpush.msra.mxu0 %v457
        %634 = vmatmul.f32.gmra.mxu0 %v472
        %v635 = vpop.f32.mrf.mxu0
        %v636 = vadd.f32 0.0, %v635
        %637 = vmatmul.f32.gmra.mxu0 %v475
        %v638 = vpop.f32.mrf.mxu0
        %v639 = vadd.f32 0.0, %v638
        %640 = vmatmul.f32.gmra.mxu0 %v478
        %v641 = vpop.f32.mrf.mxu0
        %v642 = vadd.f32 0.0, %v641
        %643 = vmatmul.f32.gmra.mxu0 %v481
        %v644 = vpop.f32.mrf.mxu0
        %v645 = vadd.f32 0.0, %v644
        %646 = vmatmul.f32.gmra.mxu0 %v484
        %v647 = vpop.f32.mrf.mxu0
        %v648 = vadd.f32 0.0, %v647
        %649 = vmatmul.f32.gmra.mxu0 %v487
        %v650 = vpop.f32.mrf.mxu0
        %v651 = vadd.f32 0.0, %v650
        %652 = vmatmul.f32.gmra.mxu0 %v490
        %v653 = vpop.f32.mrf.mxu0
        %v654 = vadd.f32 0.0, %v653
        %655 = vmatmul.f32.gmra.mxu0 %v493
        %v656 = vpop.f32.mrf.mxu0
        %v657 = vadd.f32 0.0, %v656
        %658 = vdwg.mxu0
        %v659 = vmul.f32 %v513, %v178
        %v660 = vmul.f32 %v554, %v179
        %v661 = vmul.f32 %v595, %v180
        %v662 = vmul.f32 %v636, %v181
        %v663 = vmul.f32 %v516, %v182
        %v664 = vmul.f32 %v557, %v183
        %v665 = vmul.f32 %v598, %v184
        %v666 = vmul.f32 %v639, %v185
        %v667 = vmul.f32 %v519, %v186
        %v668 = vmul.f32 %v560, %v187
        %v669 = vmul.f32 %v601, %v188
        %v670 = vmul.f32 %v642, %v189
        %v671 = vmul.f32 %v522, %v190
        %v672 = vmul.f32 %v563, %v191
        %v673 = vmul.f32 %v604, %v192
        %v674 = vmul.f32 %v645, %v193
        %v675 = vmul.f32 %v525, %v194
        %v676 = vmul.f32 %v566, %v195
        %v677 = vmul.f32 %v607, %v196
        %v678 = vmul.f32 %v648, %v197
        %v679 = vmul.f32 %v528, %v198
        %v680 = vmul.f32 %v569, %v199
        %v681 = vmul.f32 %v610, %v200
        %v682 = vmul.f32 %v651, %v201
        %v683 = vmul.f32 %v531, %v202
        %v684 = vmul.f32 %v572, %v203
        %v685 = vmul.f32 %v613, %v204
        %v686 = vmul.f32 %v654, %v205
        %v687 = vmul.f32 %v534, %v206
        %v688 = vmul.f32 %v575, %v207
        %v689 = vmul.f32 %v616, %v208
        %v690 = vmul.f32 %v657, %v209
        %691 = vst [vmem:[%s163] sm:$0xff] %v290
        %692 = vst [vmem:[%s163 + $0x8] sm:$0xff] %v291
        %693 = vst [vmem:[%s163 + $0x10] sm:$0xff] %v292
        %694 = vst [vmem:[%s163 + $0x18] sm:$0xff] %v293
        %695 = vst [vmem:[%s163 + $0x20] sm:$0xff] %v659
        %696 = vst [vmem:[%s163 + $0x28] sm:$0xff] %v660
        %697 = vst [vmem:[%s163 + $0x30] sm:$0xff] %v661
        %698 = vst [vmem:[%s163 + $0x38] sm:$0xff] %v662
        %699 = vst [vmem:[%s163 + $0x40] sm:$0xff] %v663
        %700 = vst [vmem:[%s163 + $0x48] sm:$0xff] %v664
        %701 = vst [vmem:[%s163 + $0x50] sm:$0xff] %v665
        %702 = vst [vmem:[%s163 + $0x58] sm:$0xff] %v666
        %703 = vst [vmem:[%s163 + $0x60] sm:$0xff] %v667
        %704 = vst [vmem:[%s163 + $0x68] sm:$0xff] %v668
        %705 = vst [vmem:[%s163 + $0x70] sm:$0xff] %v669
        %706 = vst [vmem:[%s163 + $0x78] sm:$0xff] %v670
        %707 = vst [vmem:[%s163 + $0x80] sm:$0xff] %v671
        %708 = vst [vmem:[%s163 + $0x88] sm:$0xff] %v672
        %709 = vst [vmem:[%s163 + $0x90] sm:$0xff] %v673
        %710 = vst [vmem:[%s163 + $0x98] sm:$0xff] %v674
        %711 = vst [vmem:[%s163 + $0xa0] sm:$0xff] %v675
        %712 = vst [vmem:[%s163 + $0xa8] sm:$0xff] %v676
        %713 = vst [vmem:[%s163 + $0xb0] sm:$0xff] %v677
        %714 = vst [vmem:[%s163 + $0xb8] sm:$0xff] %v678
        %715 = vst [vmem:[%s163 + $0xc0] sm:$0xff] %v679
        %716 = vst [vmem:[%s163 + $0xc8] sm:$0xff] %v680
        %717 = vst [vmem:[%s163 + $0xd0] sm:$0xff] %v681
        %718 = vst [vmem:[%s163 + $0xd8] sm:$0xff] %v682
        %719 = vst [vmem:[%s163 + $0xe0] sm:$0xff] %v683
        %720 = vst [vmem:[%s163 + $0xe8] sm:$0xff] %v684
        %721 = vst [vmem:[%s163 + $0xf0] sm:$0xff] %v685
        %722 = vst [vmem:[%s163 + $0xf8] sm:$0xff] %v686
        %723 = vst [vmem:[%s163 + $0x100] sm:$0xff] %v687
        %724 = vst [vmem:[%s163 + $0x108] sm:$0xff] %v688
        %725 = vst [vmem:[%s163 + $0x110] sm:$0xff] %v689
        %726 = vst [vmem:[%s163 + $0x118] sm:$0xff] %v690
        %s727 = sand.u32 %s74, 1
        %s728 = scalar_lea.sflag [#allocation4], %s727
        %s729 = sand.u32 %s74, 1
        %s730 = smul.addr %s729, 288
        %s731 = scalar_lea.vmem [#allocation5], %s730
        // Predicated region
        $region33: #{tpu_custom_call.1} parent=27 // pred_check
          %p732 = pneg %p84
        $region34: #{tpu_custom_call.1} parent=27 // pred_check_branch
          %734 = sbr.rel (%p732) target = $region36
        $region35: #{tpu_custom_call.1} parent=27 // pred_region
          %s735 = smul.u32 4, %s19
          %737 = vsyncadd %s728, 0
          %s738 = smul.addr %s735, 8
          %s739 = scalar_lea.hbm %s2, %s738
          %s740 = sshll.u32 %s731, 4
          %s741 = int_to_ptr.vmem [resolvable:$true] %s740
          %s742 = sshll.u32 %s739, 4
          %s743 = int_to_ptr.hbm [resolvable:$true] %s742
          %748 = dma.vmem_to_hbm [thread:$0]  %s741, 4608, %s743, %s728, 512, 1024, 32
        $region36: #{tpu_custom_call.1} parent=27 // pred_fallthru
          _
      $region28: #{tpu_custom_call.1} parent=5 // pred_fallthru
        _
      %p749 = scmp.le.s32.totalorder 2, %s14
      // Predicated region
      $region37: #{tpu_custom_call.1} parent=5 // pred_check
        %p750 = pneg %p749
      $region38: #{tpu_custom_call.1} parent=5 // pred_check_branch
        %752 = sbr.rel (%p750) target = $region40
      $region39: #{tpu_custom_call.1} parent=5 // pred_region
        %s753 = ssub.s32 %s14, 2
        // Predicated region
        $region41: #{tpu_custom_call.1} parent=39 // pred_check
          %p754 = pneg %p90
        $region42: #{tpu_custom_call.1} parent=39 // pred_check_branch
          %756 = sbr.rel (%p754) target = $region44
        $region43: #{tpu_custom_call.1} parent=39 // pred_region
          %s757 = sand.u32 %s75, 1
          %s758 = scalar_lea.sflag [#allocation4], %s757
          %s759 = sand.u32 %s75, 1
          %s760 = smul.addr %s759, 288
          %s761 = scalar_lea.vmem [#allocation5], %s760
          %763 = dma.done %s758, 4608
        $region44: #{tpu_custom_call.1} parent=39 // pred_fallthru
          _
      $region40: #{tpu_custom_call.1} parent=5 // pred_fallthru
        _
    $region6: #{tpu_custom_call.1} parent=1 // loop_footer
      %s18 = sadd.s32 1, %s14
    $region7: #{tpu_custom_call.1} parent=1 // loop_footer_branch
      %13 = sbr.rel target = $region3
    $region8: #{tpu_custom_call.1} parent=1 // loop_exit
      _
    %764 = vsyncpa [#allocation3], 1
    %s765 = scalar_lea.sflag [#allocation3], 1
    %766 = vsyncpa %s765, 1
    %767 = vsyncpa [#allocation4], 1
    %s768 = scalar_lea.sflag [#allocation4], 1
    %769 = vsyncpa %s768, 1

</llo_original>
